<compile_context>
chip_gen: v7x
topology: tpu7x:2x2x1
jax: 0.10.0
libtpu: 0.0.40
codegen_flags: <defaults>
</compile_context>

<pallas_src>
import jax
import jax.numpy as jnp
from jax.experimental import pallas as pl
from jax.experimental.pallas import tpu as pltpu


def _focus_maxpool_kernel(x_ref, w_ref, b_ref, o_ref):
    # x_ref: (Cin, TM) bf16  pooled Space2Depth activations, rows on lanes
    # w_ref: (Cout, Cin) bf16  1x1-conv weight with BN scale folded in
    # b_ref: (Cout, 1) f32     folded BN bias
    # o_ref: (Cout, TM)
    # 1x1 conv == channel matmul on the MXU; rows (N-side) are lane-dense.
    y = jnp.dot(w_ref[...], x_ref[...], preferred_element_type=jnp.float32)
    y = y + b_ref[...]
    # Hardswish: y * relu6(y + 3) / 6
    y = y * jnp.clip(y + 3.0, 0.0, 6.0) * (1.0 / 6.0)
    o_ref[...] = y.astype(o_ref.dtype)


def _round_up(x, m):
    return ((x + m - 1) // m) * m


def _pick_tile_m(M, desired, Cin, Cout, in_bytes, out_bytes,
                 vmem_budget=24 << 20):
    """Pick a lane-dense tile width: multiple of 128, VMEM-safe, divisor of M
    when possible (skips the standalone pad pass)."""
    # Double-buffered streaming input + output bytes per output column.
    per_col = 2 * (Cin * in_bytes + Cout * out_bytes)
    cap = max(128, (vmem_budget // per_col) // 128 * 128)
    t = max(128, (min(desired, cap, _round_up(M, 128)) // 128) * 128)
    if M % t == 0:
        return t, False
    if M % 128 == 0:
        d = t
        while d >= 128 and M % d != 0:
            d -= 128
        if d >= max(128, t // 2):
            return d, False          # close-enough divisor: no padding needed
    return t, True


def focus_maxpool(x, conv_w, bn_gamma, bn_beta, bn_mean, bn_var,
                  *, block_size=2, eps=1e-5, tile_m=2048):
    """x: NCHW float32. conv_w: (Cout, C*block_size**2, 1, 1). Returns NCHW f32."""
    N, C, H, W = x.shape
    bs = block_size
    assert H % (2 * bs) == 0 and W % (2 * bs) == 0
    Hout, Wout = H // (2 * bs), W // (2 * bs)
    Cin = C * bs * bs
    Cout = conv_w.shape[0]
    M = N * Hout * Wout

    # ---- Pool FIRST (4x data reduction), then transpose the small tensor ----
    # h = ho*(2*bs) + i*bs + bh ; w = wo*(2*bs) + j*bs + bw
    # s2d channel = (bh, bw, c) (matches the spec's permute(0,3,5,1,2,4));
    # the 2x2 max-pool reduces over the (i, j) pool window.
    # TODO(synk): full fusion (s2d+pool inside the kernel from raw NCHW via
    # memory_space=pl.ANY + strided slices) would remove this wrapper pass too.
    xr = x.reshape(N, C, Hout, 2, bs, Wout, 2, bs)
    pooled = xr.max(axis=(3, 6))                    # (N, C, Hout, bs, Wout, bs)
    # Stream the activation in bf16: halves the dominant HBM read; MXU-native.
    pooled = pooled.astype(jnp.bfloat16)
    # (bh, bw, c, n, ho, wo) -> (Cin, M); M (= n,ho,wo rows) lands on lanes.
    act = pooled.transpose(3, 5, 1, 0, 2, 4).reshape(Cin, M)

    in_bytes = 2                                    # bf16 activation stream
    out_bytes = jnp.dtype(x.dtype).itemsize
    tile_m, need_pad = _pick_tile_m(M, tile_m, Cin, Cout, in_bytes, out_bytes)
    M_pad = _round_up(M, tile_m)
    if need_pad:
        act = jnp.pad(act, ((0, 0), (0, M_pad - M)))

    # Fold inference-mode BN scale into the conv weight; keep only a bias.
    inv_std = (bn_gamma / jnp.sqrt(bn_var + eps)).astype(jnp.float32)
    w_mat = (conv_w.reshape(Cout, Cin).astype(jnp.float32)
             * inv_std[:, None]).astype(jnp.bfloat16)           # (Cout, Cin)
    bias = (bn_beta - bn_mean * inv_std).reshape(Cout, 1).astype(jnp.float32)

    grid = (M_pad // tile_m,)

    # Explicit VMEM cap: enough for the double-buffered tiles + resident
    # weight/bias, well under v7x's 64 MiB physical VMEM.
    vmem_need = (2 * tile_m * (Cin * in_bytes + Cout * out_bytes)
                 + 2 * (Cout * Cin * in_bytes + Cout * 4))
    vmem_limit = int(min(48 << 20, max(16 << 20, 4 * vmem_need)))

    out = pl.pallas_call(
        _focus_maxpool_kernel,
        out_shape=jax.ShapeDtypeStruct((Cout, M_pad), x.dtype),
        grid_spec=pltpu.PrefetchScalarGridSpec(
            num_scalar_prefetch=0,
            grid=grid,
            in_specs=[
                # Streaming activation (only operand whose block index moves).
                # If a profile shows exposed input DMA (v5e/v6e), add
                # pipeline_mode=pl.Buffered(3) here.
                pl.BlockSpec((Cin, tile_m), lambda i: (0, i)),
                # Weight / bias: constant index_map -> DMA'd once, stay resident.
                pl.BlockSpec((Cout, Cin), lambda i: (0, 0)),
                pl.BlockSpec((Cout, 1), lambda i: (0, 0)),
            ],
            out_specs=pl.BlockSpec((Cout, tile_m), lambda i: (0, i)),
        ),
        compiler_params=pltpu.CompilerParams(
            dimension_semantics=("parallel",),
            vmem_limit_bytes=vmem_limit),
    )(act, w_mat, bias)

    # (Cout, M) -> NCHW (output is much smaller than the input; cheap).
    return out[:, :M].reshape(Cout, N, Hout, Wout).transpose(1, 0, 2, 3)


def _reference(x, conv_w, gamma, beta, mean, var, block_size=2, eps=1e-5):
    """Pure-JAX f32 mirror of the PyTorch forward (eval-mode BN)."""
    N, C, H, W = x.shape
    bs = block_size
    # Space2Depth
    s = x.reshape(N, C, H // bs, bs, W // bs, bs).transpose(0, 3, 5, 1, 2, 4)
    s = s.reshape(N, C * bs * bs, H // bs, W // bs)
    # MaxPool2d(kernel=2, stride=2)
    N2, C2, H2, W2 = s.shape
    p = s.reshape(N2, C2, H2 // 2, 2, W2 // 2, 2).max(axis=(3, 5))
    # 1x1 conv (bias=False)
    y = jnp.einsum('nchw,oc->nohw', p, conv_w.reshape(conv_w.shape[0], -1))
    # BatchNorm (inference)
    sc = gamma / jnp.sqrt(var + eps)
    y = y * sc[None, :, None, None] + (beta - mean * sc)[None, :, None, None]
    # Hardswish
    return y * jnp.clip(y + 3.0, 0.0, 6.0) / 6.0


if __name__ == "__main__":
    key = jax.random.PRNGKey(0)
    N, C, H, W = 2, 4, 16, 16          # input NCHW
    block_size = 2
    out_planes = 8
    Cin = C * block_size ** 2

    k_x, k_w = jax.random.split(key)
    x = jax.random.normal(k_x, (N, C, H, W), jnp.float32)
    # Conv2d(in=Cin, out=out_planes, kernel_size=1, bias=False) weight
    conv_w = jax.random.normal(k_w, (out_planes, Cin, 1, 1), jnp.float32) * 0.1
    # BatchNorm2d params at PyTorch defaults (eval-mode)
    bn_gamma = jnp.ones((out_planes,), jnp.float32)
    bn_beta = jnp.zeros((out_planes,), jnp.float32)
    bn_mean = jnp.zeros((out_planes,), jnp.float32)
    bn_var = jnp.ones((out_planes,), jnp.float32)

    out = focus_maxpool(x, conv_w, bn_gamma, bn_beta, bn_mean, bn_var,
                        block_size=block_size)
    out = jax.block_until_ready(out)

    assert out.shape == (N, out_planes, H // 4, W // 4), out.shape
    ref = _reference(x, conv_w, bn_gamma, bn_beta, bn_mean, bn_var,
                     block_size=block_size)
    max_err = float(jnp.max(jnp.abs(out - ref)))
    # bf16 activation/weight streaming -> tolerance loosened vs the f32 ref.
    assert max_err < 5e-2, f"max abs error {max_err}"
    print("KERNEL_OK")
</pallas_src>

<mosaic_0001>
module attributes {stable_mosaic.version = 11 : i64} {
  func.func @_focus_maxpool_kernel(%arg0: i32, %arg1: memref<16x128xbf16, #tpu.memory_space<vmem>>, %arg2: memref<8x16xbf16, #tpu.memory_space<vmem>>, %arg3: memref<8x1xf32, #tpu.memory_space<vmem>>, %arg4: memref<8x128xf32, #tpu.memory_space<vmem>>) attributes {dimension_semantics = [#tpu.dimension_semantics<parallel>], iteration_bounds = array<i64: 1>, scalar_prefetch = 0 : i64, scratch_operands = 0 : i64, tpu.core_type = #tpu.core_type<tc>, window_params = [{transform_indices = @transform_0, window_bounds = array<i64: 16, 128>}, {pipeline_mode = #tpu.pipeline_mode<synchronous>, transform_indices = @transform_1, window_bounds = array<i64: 8, 16>}, {pipeline_mode = #tpu.pipeline_mode<synchronous>, transform_indices = @transform_2, window_bounds = array<i64: 8, 1>}, {transform_indices = @transform_3, window_bounds = array<i64: 8, 128>}]} {
    %c0 = arith.constant 0 : index
    %c0_0 = arith.constant 0 : index
    %0 = vector.load %arg2[%c0, %c0_0] : memref<8x16xbf16, #tpu.memory_space<vmem>>, vector<8x16xbf16>
    %c0_1 = arith.constant 0 : index
    %c0_2 = arith.constant 0 : index
    %1 = vector.load %arg1[%c0_1, %c0_2] : memref<16x128xbf16, #tpu.memory_space<vmem>>, vector<16x128xbf16>
    %cst = arith.constant dense<0.000000e+00> : vector<8x128xf32>
    %2 = tpu.matmul %0, %1, %cst {dimension_numbers = #tpu.dot_dimension_numbers<[1], [0], [0], [1], [0, 0, 1, 1], [], []>} : vector<8x16xbf16>, vector<16x128xbf16>, vector<8x128xf32> -> vector<8x128xf32>
    %c0_3 = arith.constant 0 : index
    %c0_4 = arith.constant 0 : index
    %3 = vector.load %arg3[%c0_3, %c0_4] : memref<8x1xf32, #tpu.memory_space<vmem>>, vector<8x1xf32>
    %4 = vector.broadcast %3 : vector<8x1xf32> to vector<8x128xf32>
    %5 = arith.addf %2, %4 : vector<8x128xf32>
    %cst_5 = arith.constant 3.000000e+00 : f32
    %6 = vector.broadcast %cst_5 : f32 to vector<8x128xf32>
    %7 = arith.addf %5, %6 : vector<8x128xf32>
    %cst_6 = arith.constant 0.000000e+00 : f32
    %cst_7 = arith.constant 6.000000e+00 : f32
    %8 = vector.broadcast %cst_6 : f32 to vector<8x128xf32>
    %9 = arith.maximumf %8, %7 : vector<8x128xf32>
    %10 = vector.broadcast %cst_7 : f32 to vector<8x128xf32>
    %11 = arith.minimumf %10, %9 : vector<8x128xf32>
    %12 = arith.mulf %5, %11 : vector<8x128xf32>
    %cst_8 = arith.constant 0.166666672 : f32
    %13 = vector.broadcast %cst_8 : f32 to vector<8x128xf32>
    %14 = arith.mulf %12, %13 : vector<8x128xf32>
    %c0_9 = arith.constant 0 : index
    %c0_10 = arith.constant 0 : index
    %15 = vector.load %arg4[%c0_9, %c0_10] : memref<8x128xf32, #tpu.memory_space<vmem>>, vector<8x128xf32>
    tpu.vector_store %arg4[%c0_9, %c0_10], %14 {strides = array<i32>} : memref<8x128xf32, #tpu.memory_space<vmem>>, vector<8x128xf32>,
    return
  }
  func.func @transform_0(%arg0: i32) -> (i32, i32) {
    %c0_i32 = arith.constant 0 : i32
    %c0_i32_0 = arith.constant 0 : i32
    return %c0_i32, %arg0 : i32, i32
  }
  func.func @transform_1(%arg0: i32) -> (i32, i32) {
    %c0_i32 = arith.constant 0 : i32
    %c0_i32_0 = arith.constant 0 : i32
    %c0_i32_1 = arith.constant 0 : i32
    return %c0_i32, %c0_i32_0 : i32, i32
  }
  func.func @transform_2(%arg0: i32) -> (i32, i32) {
    %c0_i32 = arith.constant 0 : i32
    %c0_i32_0 = arith.constant 0 : i32
    %c0_i32_1 = arith.constant 0 : i32
    return %c0_i32, %c0_i32_0 : i32, i32
  }
  func.func @transform_3(%arg0: i32) -> (i32, i32) {
    %c0_i32 = arith.constant 0 : i32
    %c0_i32_0 = arith.constant 0 : i32
    return %c0_i32, %arg0 : i32, i32
  }
}

</mosaic_0001>

<llo_original>
// kernel: tpu_custom_call.1
$region0: #{tpu_custom_call.1}
  #allocation0 [shape = 'u32[]', space=smem, size = 0x4, offset = 0x4, fixed_abs, tag = 'smem constant byte address 0x4 - core index']
  #allocation1 [shape = 'u32[144,128]{1,0:T(1,128)}', space=vmem, size = 0x12000, scoped, tag = 'internal scratch']
  %s0 = inlined_call_operand.vmem [shape: bf16[16,128], index: 0, kind: input, shape index: {}]
  %s1 = inlined_call_operand.vmem [shape: bf16[8,16], index: 1, kind: input, shape index: {}]
  %s2 = inlined_call_operand.vmem [shape: f32[8,1], index: 2, kind: input, shape index: {}]
  %s3 = inlined_call_operand.hbm [shape: f32[8,128], index: 3, kind: output, shape index: {}]
  %s4 = sld [smem:[#allocation0]]
  $region22: #{tpu_custom_call.1} parent=0
    _
  %s6 = ssub.s32 1, %s4
  %s7 = scalar_select 0, %s6, %s4
  $region1: #{tpu_custom_call.1} parent=0
    #allocation2 [shape = 'u8[4096]{0}', space=vmem, size = 0x1000, scoped, tag = 'output window, operand 0, single buffered']
    #allocation3 [shape = 's32[1]{0}', space=sflag, size = 0x4, scoped, tag = 'scoped memory for tpu_custom_call.1']
    %8 = vsyncpa [#allocation3], 0
    // Predicated region
    $region2: #{tpu_custom_call.1} parent=1 // pred_check
      _
    $region3: #{tpu_custom_call.1} parent=1 // pred_check_branch
      %10 = sbr.rel (0) target = $region5
    $region4: #{tpu_custom_call.1} parent=1 // pred_region
      _
    $region5: #{tpu_custom_call.1} parent=1 // pred_fallthru
      _
    // Predicated region
    $region6: #{tpu_custom_call.1} parent=1 // pred_check
      _
    $region7: #{tpu_custom_call.1} parent=1 // pred_check_branch
      %12 = sbr.rel (0) target = $region9
    $region8: #{tpu_custom_call.1} parent=1 // pred_region
      _
    $region9: #{tpu_custom_call.1} parent=1 // pred_fallthru
      _
    // Predicated region
    $region10: #{tpu_custom_call.1} parent=1 // pred_check
      _
    $region11: #{tpu_custom_call.1} parent=1 // pred_check_branch
      %14 = sbr.rel (0) target = $region13
    $region12: #{tpu_custom_call.1} parent=1 // pred_region
      _
    $region13: #{tpu_custom_call.1} parent=1 // pred_fallthru
      _
    %v16 = vld [vmem:[%s1] sm:$0xf]
    %v17 = vld [vmem:[%s0] sm:$0xf]
    %v18 = vld [vmem:[%s0 + $0x4] sm:$0xf]
    %v19 = vld [vmem:[%s2] sm:$0xff]
    %21 = vset.pattern.permute.xlu0 0
    %22 = vperm.xlu0 %21, %v19
    %v23 = vpop.permute.xlu0 %22
    %v27 = vunpack.c.l.b16 %v17
    %v28 = vunpack.c.l.b16 %v18
    %v29 = vpack.c.b16 %v28, %v27
    %vm31 = vcmask 130048
    %v33 = vsel %vm31, %v16, 0
    %35 = vmatprep.subr.bf16.mxu0 0
    %36 = vmatpush1.bf16.msra.mxu0 %v29
    %37 = vmatprep.subr.bf16.mxu0 0
    %38 = vmatpush1.bf16.msra.mxu0 0
    %39 = vmatprep.subr.bf16.mxu0 0
    %40 = vmatpush1.bf16.msra.mxu0 0
    %41 = vmatprep.subr.bf16.mxu0 0
    %42 = vmatpush1.bf16.msra.mxu0 0
    %43 = vmatprep.subr.bf16.mxu0 0
    %44 = vmatpush1.bf16.msra.mxu0 0
    %45 = vmatprep.subr.bf16.mxu0 0
    %46 = vmatpush1.bf16.msra.mxu0 0
    %47 = vmatprep.subr.bf16.mxu0 0
    %48 = vmatpush1.bf16.msra.mxu0 0
    %49 = vmatprep.subr.bf16.mxu0 0
    %50 = vmatpush1.bf16.msra.mxu0 0
    %51 = vmatprep.subr.bf16.mxu0 0
    %52 = vmatpush1.bf16.msra.mxu0 0
    %53 = vmatprep.subr.bf16.mxu0 0
    %54 = vmatpush1.bf16.msra.mxu0 0
    %55 = vmatprep.subr.bf16.mxu0 0
    %56 = vmatpush1.bf16.msra.mxu0 0
    %57 = vmatprep.subr.bf16.mxu0 0
    %58 = vmatpush1.bf16.msra.mxu0 0
    %59 = vmatprep.subr.bf16.mxu0 0
    %60 = vmatpush1.bf16.msra.mxu0 0
    %61 = vmatprep.subr.bf16.mxu0 0
    %62 = vmatpush1.bf16.msra.mxu0 0
    %63 = vmatprep.subr.bf16.mxu0 0
    %64 = vmatpush1.bf16.msra.mxu0 0
    %65 = vmatprep.subr.bf16.mxu0 0
    %66 = vmatpush1.bf16.msra.mxu0 0
    %67 = vmatprep.mubr.bf16.mxu0 0
    %68 = vmatmul.mubr.bf16.gmra.mrb[0].mxu0 %v33
    %v69 = vpop.f32.mrb[0].mxu0
    %v70 = vadd.f32 %v23, %v69
    %v71 = vpop.f32.mrb[0].mxu0
    %v72 = vpop.f32.mrb[0].mxu0
    %v73 = vpop.f32.mrb[0].mxu0
    %74 = vdwg.mxu0
    %v75 = vadd.f32 %v70, 3.0
    %v76 = vmax.f32 %v75, 0.0
    %v77 = vmin.f32 %v76, 6.0
    %v78 = vmul.f32 %v70, %v77
    %v79 = vmul.f32 %v78, 0.16666667
    %80 = vst [vmem:[#allocation2] sm:$0xff] %v79
    // Predicated region
    $region14: #{tpu_custom_call.1} parent=1 // pred_check
      _
    $region15: #{tpu_custom_call.1} parent=1 // pred_check_branch
      %82 = sbr.rel (0) target = $region17
    $region16: #{tpu_custom_call.1} parent=1 // pred_region
      %s84 = ssub.s32 128, 128
      %85 = vsyncadd [#allocation3], %s84
      %s87 = sshll.u32 [#allocation2], 4
      %s88 = int_to_ptr.vmem [resolvable:$true] %s87
      %90 = dma.vmem_to_hbm [thread:$0]  %s88, 128, %s3, [#allocation3]
    $region17: #{tpu_custom_call.1} parent=1 // pred_fallthru
      _
    // Predicated region
    $region18: #{tpu_custom_call.1} parent=1 // pred_check
      _
    $region19: #{tpu_custom_call.1} parent=1 // pred_check_branch
      %92 = sbr.rel (0) target = $region21
    $region20: #{tpu_custom_call.1} parent=1 // pred_region
      %93 = dma.done [#allocation3], 128
    $region21: #{tpu_custom_call.1} parent=1 // pred_fallthru
      _
    %94 = vsyncpa [#allocation3], 1

</llo_original>
